<compile_context>
chip_gen: v5e
topology: v5e:2x2
jax: 0.10.0
libtpu: 0.0.40
codegen_flags: <defaults>
</compile_context>

<pallas_src>
import functools

import jax
import jax.numpy as jnp
from jax.experimental import pallas as pl
from jax.experimental.pallas import tpu as pltpu


def _active_model_kernel(x_ref, ub_ref, wa_ref, wb_ref, b_ref, o_ref):
    # x_ref : [TB, D]      active-party features (batch tile)
    # ub_ref: [TB, D]      passive-party features U_B (batch tile)
    # wa_ref: [D,  Cout]   W[:, :D].T (resident)
    # wb_ref: [D,  Cout]   W[:, D:].T (resident)
    # b_ref : [1,  Cout]   bias (resident, f32)
    # o_ref : [TB, Cout]
    xa = jnp.maximum(x_ref[...], 0.0)      # ReLU (exact: relu(cat) == cat(relu))
    xb = jnp.maximum(ub_ref[...], 0.0)
    acc = jnp.dot(xa, wa_ref[...], preferred_element_type=jnp.float32)
    acc = acc + jnp.dot(xb, wb_ref[...], preferred_element_type=jnp.float32)
    o_ref[...] = (acc + b_ref[...]).astype(o_ref.dtype)


def _round_up(x, m):
    return ((x + m - 1) // m) * m


def _vmem_capacity_bytes():
    """Per-TensorCore VMEM capacity; conservative fallback (v7x) if the query fails."""
    try:
        info = pltpu.get_tpu_info()
        cap = int(getattr(info, "vmem_capacity_bytes", 0) or 0)
        if cap > 0:
            return cap
    except Exception:  # pragma: no cover - defensive
        pass
    return 64 * 1024 * 1024


def _choose_batch_tile(batch, d, c_out, in_bytes, out_bytes, vmem_budget_bytes, min_steps=4):
    """Pick TB from the VMEM budget (no artificial row cap), aligned to the dtype's sublane
    packing, and small enough that the grid has >= min_steps steps when the batch allows it
    (so both v7x TensorCores run and the double-buffer pipeline overlaps DMA with compute)."""
    sub = {1: 32, 2: 16}.get(in_bytes, 8)                   # dtype-aware sublane alignment
    per_row = 2 * (2 * d * in_bytes + c_out * out_bytes)    # double-buffered x, u_b, out
    vmem_tb = max(sub, vmem_budget_bytes // max(per_row, 1))
    target_tb = _round_up(pl.cdiv(batch, min_steps), sub)   # aim for >= min_steps grid steps
    tb = min(vmem_tb, target_tb)
    tb = max(sub, (tb // sub) * sub)
    if tb >= batch:
        return batch                                        # single full-batch tile (== full dim: legal)
    return tb


@functools.partial(jax.jit, static_argnames=("compute_dtype",))
def active_model_forward(x, u_b, weight, bias, compute_dtype=None):
    """x: [B, D], u_b: [B, D], weight: [C, 2D] (PyTorch nn.Linear layout), bias: [C] -> logits [B, C]."""
    B, D = x.shape
    C, twoD = weight.shape
    assert twoD == 2 * D and u_b.shape == (B, D) and bias.shape == (C,)

    # ---- wrapper-side layout work (fused by XLA; nothing extra inside the kernel) ----
    w_a = weight[:, :D].T          # [D, C]
    w_b = weight[:, D:].T          # [D, C]

    # Only pad the class axis when C >= 128 (lane-dense stores). For small C the output block's
    # last dim equals the full array dim (legal) and avoids inflated output writeback + post-slice.
    c_out = _round_up(C, 128) if C >= 128 else C
    pad_c = c_out - C
    if pad_c:
        w_a = jnp.pad(w_a, ((0, 0), (0, pad_c)))
        w_b = jnp.pad(w_b, ((0, 0), (0, pad_c)))
        bias_p = jnp.pad(bias, (0, pad_c))
    else:
        bias_p = bias
    bias2d = bias_p.reshape(1, c_out).astype(jnp.float32)

    if compute_dtype is not None:  # e.g. jnp.bfloat16 on v6e/v7x: halves HBM traffic, f32 accum kept
        x = x.astype(compute_dtype)
        u_b = u_b.astype(compute_dtype)
        w_a = w_a.astype(compute_dtype)
        w_b = w_b.astype(compute_dtype)
        out_dtype = jnp.dtype(compute_dtype)
    else:
        out_dtype = jnp.dtype(jnp.float32)

    in_bytes = jnp.dtype(x.dtype).itemsize
    out_bytes = out_dtype.itemsize

    # Generation-aware VMEM budgets (v7x: 64 MiB/TC, v5e/v6e: 128 MiB), with headroom.
    vmem_cap = _vmem_capacity_bytes()
    tile_budget = max(16 << 20, min(vmem_cap // 2 - (8 << 20), 48 << 20))
    vmem_limit = int(max(32 << 20, min(vmem_cap * 3 // 4, 64 << 20)))

    tb = _choose_batch_tile(B, D, c_out, in_bytes, out_bytes, tile_budget)
    grid = (pl.cdiv(B, tb),)

    cost = pl.CostEstimate(
        flops=2 * B * (2 * D) * c_out + B * c_out,
        transcendentals=0,
        bytes_accessed=(in_bytes * (2 * B * D + 2 * D * c_out)
                        + 4 * c_out
                        + out_bytes * B * c_out),
    )

    out = pl.pallas_call(
        _active_model_kernel,
        out_shape=jax.ShapeDtypeStruct((B, c_out), out_dtype),
        grid_spec=pltpu.PrefetchScalarGridSpec(
            num_scalar_prefetch=0,
            grid=grid,
            in_specs=[
                pl.BlockSpec((tb, D), lambda i: (i, 0)),       # x batch tile
                pl.BlockSpec((tb, D), lambda i: (i, 0)),       # u_b batch tile
                pl.BlockSpec((D, c_out), lambda i: (0, 0)),    # W_a (resident)
                pl.BlockSpec((D, c_out), lambda i: (0, 0)),    # W_b (resident)
                pl.BlockSpec((1, c_out), lambda i: (0, 0)),    # bias (resident)
            ],
            out_specs=pl.BlockSpec((tb, c_out), lambda i: (i, 0)),
        ),
        compiler_params=pltpu.CompilerParams(
            dimension_semantics=("parallel",),                 # pipelines + shards across v7x's 2 TCs
            vmem_limit_bytes=vmem_limit,
        ),
        cost_estimate=cost,
    )(x, u_b, w_a, w_b, bias2d)

    if pad_c:
        out = out[:, :C]
    return out


if __name__ == "__main__":
    # Small shapes consistent with the module: input_dim=16, k=2, num_classes=8, batch=4.
    B, input_dim, k, num_classes = 4, 16, 2, 8

    key = jax.random.PRNGKey(0)
    kx, ku, kw, kb = jax.random.split(key, 4)

    x = jax.random.normal(kx, (B, input_dim), dtype=jnp.float32)
    u_b = jax.random.normal(ku, (B, input_dim), dtype=jnp.float32)

    # Deterministic parameter init (shapes match nn.Linear(input_dim*k, num_classes)).
    fan_in = input_dim * k
    bound = 1.0 / (fan_in ** 0.5)
    weight = jax.random.uniform(kw, (num_classes, fan_in), jnp.float32, -bound, bound)
    bias = jax.random.uniform(kb, (num_classes,), jnp.float32, -bound, bound)

    def ref_fwd(xx, uu):
        return jnp.maximum(jnp.concatenate([xx, uu], axis=1), 0.0) @ weight.T + bias

    # 1) Tiny batch (single grid step, blocks equal full dims).
    logits = active_model_forward(x, u_b, weight, bias)
    logits = jax.block_until_ready(logits)
    assert logits.shape == (B, num_classes)
    assert jnp.allclose(logits, ref_fwd(x, u_b), atol=1e-5, rtol=1e-5), "mismatch vs reference (B=4)"

    # 2) Larger batch exercising the multi-step batch-tiled grid (>= 4 steps).
    B2 = 64
    kx2, ku2 = jax.random.split(jax.random.PRNGKey(1), 2)
    x2 = jax.random.normal(kx2, (B2, input_dim), dtype=jnp.float32)
    u2 = jax.random.normal(ku2, (B2, input_dim), dtype=jnp.float32)
    logits2 = jax.block_until_ready(active_model_forward(x2, u2, weight, bias))
    assert logits2.shape == (B2, num_classes)
    assert jnp.allclose(logits2, ref_fwd(x2, u2), atol=1e-5, rtol=1e-5), "mismatch vs reference (B=64)"

    print("KERNEL_OK")
</pallas_src>

<mosaic_0001>
module attributes {stable_mosaic.version = 11 : i64} {
  func.func @_active_model_kernel(%arg0: i32, %arg1: memref<4x16xf32, #tpu.memory_space<vmem>>, %arg2: memref<4x16xf32, #tpu.memory_space<vmem>>, %arg3: memref<16x8xf32, #tpu.memory_space<vmem>>, %arg4: memref<16x8xf32, #tpu.memory_space<vmem>>, %arg5: memref<1x8xf32, #tpu.memory_space<vmem>>, %arg6: memref<4x8xf32, #tpu.memory_space<vmem>>) attributes {dimension_semantics = [#tpu.dimension_semantics<parallel>], iteration_bounds = array<i64: 1>, scalar_prefetch = 0 : i64, scratch_operands = 0 : i64, tpu.core_type = #tpu.core_type<tc>, window_params = [{transform_indices = @transform_0, window_bounds = array<i64: 4, 16>}, {transform_indices = @transform_1, window_bounds = array<i64: 4, 16>}, {pipeline_mode = #tpu.pipeline_mode<synchronous>, transform_indices = @transform_2, window_bounds = array<i64: 16, 8>}, {pipeline_mode = #tpu.pipeline_mode<synchronous>, transform_indices = @transform_3, window_bounds = array<i64: 16, 8>}, {pipeline_mode = #tpu.pipeline_mode<synchronous>, transform_indices = @transform_4, window_bounds = array<i64: 1, 8>}, {transform_indices = @transform_5, window_bounds = array<i64: 4, 8>}]} {
    %c0 = arith.constant 0 : index
    %c0_0 = arith.constant 0 : index
    %0 = vector.load %arg1[%c0, %c0_0] : memref<4x16xf32, #tpu.memory_space<vmem>>, vector<4x16xf32>
    %cst = arith.constant 0.000000e+00 : f32
    %1 = vector.broadcast %cst : f32 to vector<4x16xf32>
    %2 = arith.maximumf %0, %1 : vector<4x16xf32>
    %c0_1 = arith.constant 0 : index
    %c0_2 = arith.constant 0 : index
    %3 = vector.load %arg2[%c0_1, %c0_2] : memref<4x16xf32, #tpu.memory_space<vmem>>, vector<4x16xf32>
    %cst_3 = arith.constant 0.000000e+00 : f32
    %4 = vector.broadcast %cst_3 : f32 to vector<4x16xf32>
    %5 = arith.maximumf %3, %4 : vector<4x16xf32>
    %c0_4 = arith.constant 0 : index
    %c0_5 = arith.constant 0 : index
    %6 = vector.load %arg3[%c0_4, %c0_5] : memref<16x8xf32, #tpu.memory_space<vmem>>, vector<16x8xf32>
    %cst_6 = arith.constant dense<0.000000e+00> : vector<4x8xf32>
    %7 = tpu.matmul %2, %6, %cst_6 {dimension_numbers = #tpu.dot_dimension_numbers<[1], [0], [0], [1], [0, 0, 1, 1], [], []>} : vector<4x16xf32>, vector<16x8xf32>, vector<4x8xf32> -> vector<4x8xf32>
    %c0_7 = arith.constant 0 : index
    %c0_8 = arith.constant 0 : index
    %8 = vector.load %arg4[%c0_7, %c0_8] : memref<16x8xf32, #tpu.memory_space<vmem>>, vector<16x8xf32>
    %cst_9 = arith.constant dense<0.000000e+00> : vector<4x8xf32>
    %9 = tpu.matmul %5, %8, %cst_9 {dimension_numbers = #tpu.dot_dimension_numbers<[1], [0], [0], [1], [0, 0, 1, 1], [], []>} : vector<4x16xf32>, vector<16x8xf32>, vector<4x8xf32> -> vector<4x8xf32>
    %10 = arith.addf %7, %9 : vector<4x8xf32>
    %c0_10 = arith.constant 0 : index
    %c0_11 = arith.constant 0 : index
    %11 = vector.load %arg5[%c0_10, %c0_11] : memref<1x8xf32, #tpu.memory_space<vmem>>, vector<1x8xf32>
    %12 = vector.broadcast %11 : vector<1x8xf32> to vector<4x8xf32>
    %13 = arith.addf %10, %12 : vector<4x8xf32>
    %c0_12 = arith.constant 0 : index
    %c0_13 = arith.constant 0 : index
    %14 = vector.load %arg6[%c0_12, %c0_13] : memref<4x8xf32, #tpu.memory_space<vmem>>, vector<4x8xf32>
    tpu.vector_store %arg6[%c0_12, %c0_13], %13 {strides = array<i32>} : memref<4x8xf32, #tpu.memory_space<vmem>>, vector<4x8xf32>,
    return
  }
  func.func @transform_0(%arg0: i32) -> (i32, i32) {
    %c0_i32 = arith.constant 0 : i32
    %c0_i32_0 = arith.constant 0 : i32
    return %arg0, %c0_i32 : i32, i32
  }
  func.func @transform_1(%arg0: i32) -> (i32, i32) {
    %c0_i32 = arith.constant 0 : i32
    %c0_i32_0 = arith.constant 0 : i32
    return %arg0, %c0_i32 : i32, i32
  }
  func.func @transform_2(%arg0: i32) -> (i32, i32) {
    %c0_i32 = arith.constant 0 : i32
    %c0_i32_0 = arith.constant 0 : i32
    %c0_i32_1 = arith.constant 0 : i32
    return %c0_i32, %c0_i32_0 : i32, i32
  }
  func.func @transform_3(%arg0: i32) -> (i32, i32) {
    %c0_i32 = arith.constant 0 : i32
    %c0_i32_0 = arith.constant 0 : i32
    %c0_i32_1 = arith.constant 0 : i32
    return %c0_i32, %c0_i32_0 : i32, i32
  }
  func.func @transform_4(%arg0: i32) -> (i32, i32) {
    %c0_i32 = arith.constant 0 : i32
    %c0_i32_0 = arith.constant 0 : i32
    %c0_i32_1 = arith.constant 0 : i32
    return %c0_i32, %c0_i32_0 : i32, i32
  }
  func.func @transform_5(%arg0: i32) -> (i32, i32) {
    %c0_i32 = arith.constant 0 : i32
    %c0_i32_0 = arith.constant 0 : i32
    return %arg0, %c0_i32 : i32, i32
  }
}

</mosaic_0001>

<llo_original>
// kernel: active_model_forward.1
$region0: #{active_model_forward.1}
  #allocation0 [shape = 'u32[]', space=smem, size = 0x4, offset = 0x4, fixed_abs, tag = 'smem constant byte address 0x4 - core index']
  #allocation1 [shape = 'u32[72,128]{1,0:T(1,128)}', space=vmem, size = 0x9000, scoped, tag = 'internal scratch']
  %s0 = inlined_call_operand.vmem [shape: f32[4,16], index: 0, kind: input, shape index: {}]
  %s1 = inlined_call_operand.vmem [shape: f32[4,16], index: 1, kind: input, shape index: {}]
  %s2 = inlined_call_operand.vmem [shape: f32[16,8], index: 2, kind: input, shape index: {}]
  %s3 = inlined_call_operand.vmem [shape: f32[16,8], index: 3, kind: input, shape index: {}]
  %s4 = inlined_call_operand.vmem [shape: f32[1,8], index: 4, kind: input, shape index: {}]
  %s5 = inlined_call_operand.hbm [shape: f32[4,8], index: 5, kind: output, shape index: {}]
  %s6 = sld [smem:[#allocation0]]
  $region30: #{active_model_forward.1} parent=0
    _
  %s8 = ssub.s32 1, %s6
  %s9 = scalar_select 0, %s8, %s6
  $region1: #{active_model_forward.1} parent=0
    #allocation2 [shape = 'u8[2048]{0}', space=vmem, size = 0x800, scoped, tag = 'output window, operand 0, single buffered']
    #allocation3 [shape = 's32[1]{0}', space=sflag, size = 0x4, scoped, tag = 'scoped memory for active_model_forward.1']
    %10 = vsyncpa [#allocation3], 0
    // Predicated region
    $region2: #{active_model_forward.1} parent=1 // pred_check
      _
    $region3: #{active_model_forward.1} parent=1 // pred_check_branch
      %12 = sbr.rel (0) target = $region5
    $region4: #{active_model_forward.1} parent=1 // pred_region
      _
    $region5: #{active_model_forward.1} parent=1 // pred_fallthru
      _
    // Predicated region
    $region6: #{active_model_forward.1} parent=1 // pred_check
      _
    $region7: #{active_model_forward.1} parent=1 // pred_check_branch
      %14 = sbr.rel (0) target = $region9
    $region8: #{active_model_forward.1} parent=1 // pred_region
      _
    $region9: #{active_model_forward.1} parent=1 // pred_fallthru
      _
    // Predicated region
    $region10: #{active_model_forward.1} parent=1 // pred_check
      _
    $region11: #{active_model_forward.1} parent=1 // pred_check_branch
      %16 = sbr.rel (0) target = $region13
    $region12: #{active_model_forward.1} parent=1 // pred_region
      _
    $region13: #{active_model_forward.1} parent=1 // pred_fallthru
      _
    // Predicated region
    $region14: #{active_model_forward.1} parent=1 // pred_check
      _
    $region15: #{active_model_forward.1} parent=1 // pred_check_branch
      %18 = sbr.rel (0) target = $region17
    $region16: #{active_model_forward.1} parent=1 // pred_region
      _
    $region17: #{active_model_forward.1} parent=1 // pred_fallthru
      _
    // Predicated region
    $region18: #{active_model_forward.1} parent=1 // pred_check
      _
    $region19: #{active_model_forward.1} parent=1 // pred_check_branch
      %20 = sbr.rel (0) target = $region21
    $region20: #{active_model_forward.1} parent=1 // pred_region
      _
    $region21: #{active_model_forward.1} parent=1 // pred_fallthru
      _
    %v21 = vld [vmem:[%s0] sm:$0xf]
    %v22 = vmax.f32 %v21, 0.0
    %v23 = vld [vmem:[%s1] sm:$0xf]
    %v24 = vmax.f32 %v23, 0.0
    %v25 = vld [vmem:[%s2] sm:$0xff]
    %v26 = vld [vmem:[%s2 + $0x8] sm:$0xff]
    %v27 = vld [vmem:[%s3] sm:$0xff]
    %v28 = vld [vmem:[%s3 + $0x8] sm:$0xff]
    %vm29 = vcmask 130048
    %v31 = vsel %vm29, %v24, 0
    %33 = vmatpush.msra.mxu0 0.0
    %34 = vmatpush.msra.mxu0 0.0
    %35 = vmatpush.msra.mxu0 0.0
    %36 = vmatpush.msra.mxu0 0.0
    %37 = vmatpush.msra.mxu0 0.0
    %38 = vmatpush.msra.mxu0 0.0
    %39 = vmatpush.msra.mxu0 0.0
    %40 = vmatpush.msra.mxu0 0.0
    %41 = vmatpush.msra.mxu0 0.0
    %42 = vmatpush.msra.mxu0 0.0
    %43 = vmatpush.msra.mxu0 0.0
    %44 = vmatpush.msra.mxu0 0.0
    %45 = vmatpush.msra.mxu0 0.0
    %46 = vmatpush.msra.mxu0 0.0
    %47 = vmatpush.msra.mxu0 %v28
    %48 = vmatpush.msra.mxu0 %v27
    %49 = vmatmul.f32.gmra.mxu0 %v31
    %v50 = vpop.f32.mrf.mxu0
    %v51 = vadd.f32 0.0, %v50
    %52 = vdwg.mxu0
    %v54 = vsel %vm29, %v22, 0
    %56 = vmatpush.msra.mxu0 0.0
    %57 = vmatpush.msra.mxu0 0.0
    %58 = vmatpush.msra.mxu0 0.0
    %59 = vmatpush.msra.mxu0 0.0
    %60 = vmatpush.msra.mxu0 0.0
    %61 = vmatpush.msra.mxu0 0.0
    %62 = vmatpush.msra.mxu0 0.0
    %63 = vmatpush.msra.mxu0 0.0
    %64 = vmatpush.msra.mxu0 0.0
    %65 = vmatpush.msra.mxu0 0.0
    %66 = vmatpush.msra.mxu0 0.0
    %67 = vmatpush.msra.mxu0 0.0
    %68 = vmatpush.msra.mxu0 0.0
    %69 = vmatpush.msra.mxu0 0.0
    %70 = vmatpush.msra.mxu0 %v26
    %71 = vmatpush.msra.mxu0 %v25
    %72 = vmatmul.f32.gmra.mxu0 %v54
    %v73 = vpop.f32.mrf.mxu0
    %v74 = vadd.f32 %v51, %v73
    %75 = vdwg.mxu0
    %v76 = vld [vmem:[%s4] sm:$0x1]
    %v78 = vperm.slane %v76, 0
    %v80 = vadd.f32 %v74, %v78
    %vm81 = vcmask 60416
    %82 = vst.msk [vmem:[#allocation2] sm:$0xf] %vm81, %v80
    // Predicated region
    $region22: #{active_model_forward.1} parent=1 // pred_check
      _
    $region23: #{active_model_forward.1} parent=1 // pred_check_branch
      %84 = sbr.rel (0) target = $region25
    $region24: #{active_model_forward.1} parent=1 // pred_region
      %86 = vsyncadd [#allocation3], 0
      %s88 = sshll.u32 [#allocation2], 4
      %s89 = int_to_ptr.vmem [resolvable:$true] %s88
      %s90 = sshll.u32 %s5, 4
      %s91 = int_to_ptr.hbm [resolvable:$true] %s90
      %93 = dma.vmem_to_hbm [thread:$0]  %s89, 64, %s91, [#allocation3]
    $region25: #{active_model_forward.1} parent=1 // pred_fallthru
      _
    // Predicated region
    $region26: #{active_model_forward.1} parent=1 // pred_check
      _
    $region27: #{active_model_forward.1} parent=1 // pred_check_branch
      %95 = sbr.rel (0) target = $region29
    $region28: #{active_model_forward.1} parent=1 // pred_region
      %97 = dma.done [#allocation3], 64
    $region29: #{active_model_forward.1} parent=1 // pred_fallthru
      _
    %98 = vsyncpa [#allocation3], 1

</llo_original>
